<compile_context>
chip_gen: v7x
topology: tpu7x:2x2x1
jax: 0.10.0
libtpu: 0.0.40
codegen_flags: <defaults>
</compile_context>

<pallas_src>
import jax
import jax.numpy as jnp
from jax.experimental import pallas as pl
from jax.experimental.pallas import tpu as pltpu
import numpy as np


def _round_up(x, m):
    return ((x + m - 1) // m) * m


# ---------------------------------------------------------------------------
# Batch-invariant precompute (run once per weight update, not per forward).
# ---------------------------------------------------------------------------
def prepare_fused_weight(adjacency, importance, conv_weight,
                         compute_dtype=jnp.bfloat16):
    """Returns G of shape (Kp, OVp), zero-padded to multiples of 128, where
       G[k*C*V + c*V + u, o*V + v] =
           conv_weight[o, c, 0, k] * adjacency[v, u] * importance[c, v, u]."""
    C, V, _ = importance.shape
    O, C_w, one, K = conv_weight.shape
    assert C_w == C and one == 1
    f32 = jnp.float32

    w_ci = adjacency[None].astype(f32) * importance.astype(f32)              # (C, V, V)
    wt = conv_weight[:, :, 0, :].astype(f32)                                 # (O, C, K)
    G = jnp.einsum('ock,cvu->kcuov', wt, w_ci).reshape(K * C * V, O * V)     # (KCV, OV)

    Kc, OV = K * C * V, O * V
    Kp, OVp = _round_up(Kc, 128), _round_up(OV, 128)
    G = jnp.pad(G, ((0, Kp - Kc), (0, OVp - OV)))                            # zero cols/rows
    return G.astype(compute_dtype)


# ---------------------------------------------------------------------------
# Kernel: one aligned MXU matmul, full arrays resident in VMEM (no grid).
# ---------------------------------------------------------------------------
def _matmul_kernel(x_ref, g_ref, o_ref):
    o_ref[...] = jnp.dot(x_ref[...], g_ref[...],
                         preferred_element_type=jnp.float32).astype(o_ref.dtype)


def graph_temporal_conv_apply(x, G, *, out_channels, kernel_length,
                              compute_dtype=jnp.bfloat16):
    """x: (N, C, V, T); G: fused/padded weight from prepare_fused_weight."""
    N, C, V, T = x.shape
    K, O = kernel_length, out_channels
    # PyTorch padding='same' (stride 1, dilation 1): left = (K-1)//2, right = K-1-left.
    left = (K - 1) // 2
    right = K - 1 - left

    # im2col over the K temporal taps, batch folded into M:
    #   xcol[n*T + t, k*C*V + c*V + u] = x[n, c, u, t + k - left]   (zero padded in time)
    xT = jnp.transpose(x, (0, 3, 1, 2)).reshape(N, T, C * V).astype(jnp.float32)
    xTpad = jnp.pad(xT, ((0, 0), (left, right), (0, 0)))                     # (N, T+K-1, CV)
    xcol = jnp.stack([xTpad[:, k:k + T, :] for k in range(K)], axis=2)       # (N, T, K, CV)
    xcol = xcol.reshape(N * T, K * C * V)

    M, Kc = xcol.shape
    Kp, OVp = G.shape
    OV = O * V
    Mp = _round_up(M, 8)
    xcol = jnp.pad(xcol, ((0, Mp - M), (0, Kp - Kc))).astype(compute_dtype)

    cost = pl.CostEstimate(
        flops=2 * Mp * Kp * OVp,
        transcendentals=0,
        bytes_accessed=(xcol.size * xcol.dtype.itemsize
                        + G.size * G.dtype.itemsize
                        + Mp * OVp * 4),
    )

    out2d = pl.pallas_call(
        _matmul_kernel,
        out_shape=jax.ShapeDtypeStruct((Mp, OVp), jnp.float32),
        in_specs=[pl.BlockSpec(memory_space=pltpu.MemorySpace.VMEM),
                  pl.BlockSpec(memory_space=pltpu.MemorySpace.VMEM)],
        out_specs=pl.BlockSpec(memory_space=pltpu.MemorySpace.VMEM),
        cost_estimate=cost,
    )(xcol, G)

    # (N*T, O*V) -> (N, O, V, T)
    out = out2d[:M, :OV].reshape(N, T, O, V).transpose(0, 2, 3, 1)
    return out.astype(x.dtype)


def graph_temporal_conv(x, adjacency, importance, conv_weight,
                        compute_dtype=jnp.bfloat16):
    O, _, _, K = conv_weight.shape
    G = prepare_fused_weight(adjacency, importance, conv_weight, compute_dtype)
    return graph_temporal_conv_apply(x, G, out_channels=O, kernel_length=K,
                                     compute_dtype=compute_dtype)


# ---------------------------------------------------------------------------
# Pure-JAX reference matching the PyTorch forward.
# ---------------------------------------------------------------------------
def reference(x, adjacency, importance, conv_weight):
    N, C, V, T = x.shape
    O, _, _, K = conv_weight.shape
    left = (K - 1) // 2
    right = K - 1 - left
    w = adjacency[None] * importance                        # (C, V, V)
    y = jnp.einsum('cvu,ncut->ncvt', w, x)                  # graph aggregation
    yp = jnp.pad(y, ((0, 0), (0, 0), (0, 0), (left, right)))
    wt = conv_weight[:, :, 0, :]                            # (O, C, K)
    out = jnp.zeros((N, O, V, T), x.dtype)
    for k in range(K):
        out = out + jnp.einsum('oc,ncvt->novt', wt[:, :, k], yp[..., k:k + T])
    return out


if __name__ == "__main__":
    N, C_in, C_out, V, T, K = 2, 4, 8, 16, 16, 3

    key = jax.random.PRNGKey(0)
    k_adj, k_imp, k_w, k_x = jax.random.split(key, 4)

    adjacency = jax.random.normal(k_adj, (V, V), dtype=jnp.float32)          # buffer
    importance = jax.random.normal(k_imp, (C_in, V, V), dtype=jnp.float32)   # nn.Parameter
    conv_weight = jax.random.normal(k_w, (C_out, C_in, 1, K), dtype=jnp.float32) * 0.1
    x = jax.random.normal(k_x, (N, C_in, V, T), dtype=jnp.float32)

    ref = jax.block_until_ready(reference(x, adjacency, importance, conv_weight))

    # f32-operand path: tight check of the fused-G / im2col formulation.
    out_f32 = jax.block_until_ready(
        graph_temporal_conv(x, adjacency, importance, conv_weight,
                            compute_dtype=jnp.float32))
    np.testing.assert_allclose(np.asarray(out_f32), np.asarray(ref),
                               rtol=1e-4, atol=1e-4)

    # bf16-operand path (default, per perf review): f32 accumulation, looser tolerance.
    out_bf16 = jax.block_until_ready(
        graph_temporal_conv(x, adjacency, importance, conv_weight))
    np.testing.assert_allclose(np.asarray(out_bf16), np.asarray(ref),
                               rtol=5e-2, atol=5e-2)

    print("KERNEL_OK")
</pallas_src>

<mosaic_0001>
module attributes {stable_mosaic.version = 11 : i64} {
  func.func @_matmul_kernel(%arg0: memref<32x256xf32, #tpu.memory_space<vmem>>, %arg1: memref<256x128xf32, #tpu.memory_space<vmem>>, %arg2: memref<32x128xf32, #tpu.memory_space<vmem>>) attributes {dimension_semantics = [], scalar_prefetch = 0 : i64, scratch_operands = 0 : i64, tpu.core_type = #tpu.core_type<tc>} {
    %c0 = arith.constant 0 : index
    %c0_0 = arith.constant 0 : index
    %0 = vector.load %arg0[%c0, %c0_0] : memref<32x256xf32, #tpu.memory_space<vmem>>, vector<32x256xf32>
    %c0_1 = arith.constant 0 : index
    %c0_2 = arith.constant 0 : index
    %1 = vector.load %arg1[%c0_1, %c0_2] : memref<256x128xf32, #tpu.memory_space<vmem>>, vector<256x128xf32>
    %cst = arith.constant dense<0.000000e+00> : vector<32x128xf32>
    %2 = tpu.matmul %0, %1, %cst {dimension_numbers = #tpu.dot_dimension_numbers<[1], [0], [0], [1], [0, 0, 1, 1], [], []>} : vector<32x256xf32>, vector<256x128xf32>, vector<32x128xf32> -> vector<32x128xf32>
    %c0_3 = arith.constant 0 : index
    %c0_4 = arith.constant 0 : index
    %3 = vector.load %arg2[%c0_3, %c0_4] : memref<32x128xf32, #tpu.memory_space<vmem>>, vector<32x128xf32>
    tpu.vector_store %arg2[%c0_3, %c0_4], %2 {strides = array<i32>} : memref<32x128xf32, #tpu.memory_space<vmem>>, vector<32x128xf32>,
    return
  }
}

</mosaic_0001>

<llo_original>
// kernel: tpu_custom_call.1
$region0: #{tpu_custom_call.1}
  #allocation0 [shape = 'u32[]', space=smem, size = 0x4, offset = 0x4, fixed_abs, tag = 'smem constant byte address 0x4 - core index']
  #allocation1 [shape = 'u32[144,128]{1,0:T(1,128)}', space=vmem, size = 0x12000, scoped, tag = 'internal scratch']
  %s0 = inlined_call_operand.hbm [shape: f32[32,256], index: 0, kind: input, shape index: {}]
  %s1 = inlined_call_operand.hbm [shape: f32[256,128], index: 1, kind: input, shape index: {}]
  %s2 = inlined_call_operand.hbm [shape: f32[32,128], index: 2, kind: output, shape index: {}]
  %s3 = sld [smem:[#allocation0]]
  $region26: #{tpu_custom_call.1} parent=0
    _
  %s5 = ssub.s32 1, %s3
  %s6 = scalar_select 0, %s5, %s3
  $region1: #{tpu_custom_call.1} parent=0
    #allocation2 [shape = 'u8[32768]{0}', space=vmem, size = 0x8000, scoped, tag = 'input window, operand 0, single buffered']
    #allocation3 [shape = 's32[1]{0}', space=sflag, size = 0x4, scoped, tag = 'scoped memory for tpu_custom_call.1']
    #allocation4 [shape = 's32[1]{0}', space=sflag, size = 0x4, scoped, tag = 'scoped memory for tpu_custom_call.1']
    #allocation5 [shape = 'u8[131072]{0}', space=vmem, size = 0x20000, scoped, tag = 'input window, operand 1, single buffered']
    #allocation6 [shape = 's32[1]{0}', space=sflag, size = 0x4, scoped, tag = 'scoped memory for tpu_custom_call.1']
    #allocation7 [shape = 'u8[16384]{0}', space=vmem, size = 0x4000, scoped, tag = 'output window, operand 0, single buffered']
    %7 = vsyncpa [#allocation3], 0
    %8 = vsyncpa [#allocation6], 0
    %9 = vsyncpa [#allocation4], 0
    // Predicated region
    $region2: #{tpu_custom_call.1} parent=1 // pred_check
      _
    $region3: #{tpu_custom_call.1} parent=1 // pred_check_branch
      %11 = sbr.rel (0) target = $region5
    $region4: #{tpu_custom_call.1} parent=1 // pred_region
      %s13 = ssub.s32 1024, 1024
      %14 = vsyncadd [#allocation3], %s13
      %s15 = sshll.u32 [#allocation2], 4
      %s16 = int_to_ptr.vmem [resolvable:$true] %s15
      %21 = dma.hbm_to_vmem [thread:$0]  %s0, 1024, %s16, [#allocation3], 256, 256, 16
    $region5: #{tpu_custom_call.1} parent=1 // pred_fallthru
      _
    // Predicated region
    $region6: #{tpu_custom_call.1} parent=1 // pred_check
      _
    $region7: #{tpu_custom_call.1} parent=1 // pred_check_branch
      %23 = sbr.rel (0) target = $region9
    $region8: #{tpu_custom_call.1} parent=1 // pred_region
      %s25 = ssub.s32 4096, 4096
      %26 = vsyncadd [#allocation6], %s25
      %s27 = sshll.u32 [#allocation5], 4
      %s28 = int_to_ptr.vmem [resolvable:$true] %s27
      %33 = dma.hbm_to_vmem [thread:$0]  %s1, 4096, %s28, [#allocation6], 128, 128, 8
    $region9: #{tpu_custom_call.1} parent=1 // pred_fallthru
      _
    // Predicated region
    $region10: #{tpu_custom_call.1} parent=1 // pred_check
      _
    $region11: #{tpu_custom_call.1} parent=1 // pred_check_branch
      %35 = sbr.rel (0) target = $region13
    $region12: #{tpu_custom_call.1} parent=1 // pred_region
      %36 = dma.done [#allocation3], 1024
    $region13: #{tpu_custom_call.1} parent=1 // pred_fallthru
      _
    // Predicated region
    $region14: #{tpu_custom_call.1} parent=1 // pred_check
      _
    $region15: #{tpu_custom_call.1} parent=1 // pred_check_branch
      %38 = sbr.rel (0) target = $region17
    $region16: #{tpu_custom_call.1} parent=1 // pred_region
      %39 = dma.done [#allocation6], 4096
    $region17: #{tpu_custom_call.1} parent=1 // pred_fallthru
      _
    %v40 = vld [vmem:[#allocation2] sm:$0xff]
    %v41 = vld [vmem:[#allocation2 + $0x8] sm:$0xff]
    %v42 = vld [vmem:[#allocation2 + $0x10] sm:$0xff]
    %v43 = vld [vmem:[#allocation2 + $0x18] sm:$0xff]
    %v44 = vld [vmem:[#allocation2 + $0x20] sm:$0xff]
    %v45 = vld [vmem:[#allocation2 + $0x28] sm:$0xff]
    %v46 = vld [vmem:[#allocation2 + $0x30] sm:$0xff]
    %v47 = vld [vmem:[#allocation2 + $0x38] sm:$0xff]
    %v48 = vld [vmem:[#allocation5] sm:$0xff]
    %v49 = vld [vmem:[#allocation5 + $0x8] sm:$0xff]
    %v50 = vld [vmem:[#allocation5 + $0x10] sm:$0xff]
    %v51 = vld [vmem:[#allocation5 + $0x18] sm:$0xff]
    %v52 = vld [vmem:[#allocation5 + $0x20] sm:$0xff]
    %v53 = vld [vmem:[#allocation5 + $0x28] sm:$0xff]
    %v54 = vld [vmem:[#allocation5 + $0x30] sm:$0xff]
    %v55 = vld [vmem:[#allocation5 + $0x38] sm:$0xff]
    %v56 = vld [vmem:[#allocation5 + $0x40] sm:$0xff]
    %v57 = vld [vmem:[#allocation5 + $0x48] sm:$0xff]
    %v58 = vld [vmem:[#allocation5 + $0x50] sm:$0xff]
    %v59 = vld [vmem:[#allocation5 + $0x58] sm:$0xff]
    %v60 = vld [vmem:[#allocation5 + $0x60] sm:$0xff]
    %v61 = vld [vmem:[#allocation5 + $0x68] sm:$0xff]
    %v62 = vld [vmem:[#allocation5 + $0x70] sm:$0xff]
    %v63 = vld [vmem:[#allocation5 + $0x78] sm:$0xff]
    %v64 = vld [vmem:[#allocation5 + $0x80] sm:$0xff]
    %v65 = vld [vmem:[#allocation5 + $0x88] sm:$0xff]
    %v66 = vld [vmem:[#allocation5 + $0x90] sm:$0xff]
    %v67 = vld [vmem:[#allocation5 + $0x98] sm:$0xff]
    %v68 = vld [vmem:[#allocation5 + $0xa0] sm:$0xff]
    %v69 = vld [vmem:[#allocation5 + $0xa8] sm:$0xff]
    %v70 = vld [vmem:[#allocation5 + $0xb0] sm:$0xff]
    %v71 = vld [vmem:[#allocation5 + $0xb8] sm:$0xff]
    %v72 = vld [vmem:[#allocation5 + $0xc0] sm:$0xff]
    %v73 = vld [vmem:[#allocation5 + $0xc8] sm:$0xff]
    %v74 = vld [vmem:[#allocation5 + $0xd0] sm:$0xff]
    %v75 = vld [vmem:[#allocation5 + $0xd8] sm:$0xff]
    %v76 = vld [vmem:[#allocation5 + $0xe0] sm:$0xff]
    %v77 = vld [vmem:[#allocation5 + $0xe8] sm:$0xff]
    %v78 = vld [vmem:[#allocation5 + $0xf0] sm:$0xff]
    %v79 = vld [vmem:[#allocation5 + $0xf8] sm:$0xff]
    %80 = vmatprep.subr.mxu0 0.0
    %81 = vmatpush1.msra.mxu0 %v48
    %82 = vmatprep.subr.mxu0 0.0
    %83 = vmatpush1.msra.mxu0 %v49
    %84 = vmatprep.subr.mxu0 0.0
    %85 = vmatpush1.msra.mxu0 %v50
    %86 = vmatprep.subr.mxu0 0.0
    %87 = vmatpush1.msra.mxu0 %v51
    %88 = vmatprep.subr.mxu0 0.0
    %89 = vmatpush1.msra.mxu0 %v52
    %90 = vmatprep.subr.mxu0 0.0
    %91 = vmatpush1.msra.mxu0 %v53
    %92 = vmatprep.subr.mxu0 0.0
    %93 = vmatpush1.msra.mxu0 %v54
    %94 = vmatprep.subr.mxu0 0.0
    %95 = vmatpush1.msra.mxu0 %v55
    %96 = vmatprep.subr.mxu0 0.0
    %97 = vmatpush1.msra.mxu0 %v56
    %98 = vmatprep.subr.mxu0 0.0
    %99 = vmatpush1.msra.mxu0 %v57
    %100 = vmatprep.subr.mxu0 0.0
    %101 = vmatpush1.msra.mxu0 %v58
    %102 = vmatprep.subr.mxu0 0.0
    %103 = vmatpush1.msra.mxu0 %v59
    %104 = vmatprep.subr.mxu0 0.0
    %105 = vmatpush1.msra.mxu0 %v60
    %106 = vmatprep.subr.mxu0 0.0
    %107 = vmatpush1.msra.mxu0 %v61
    %108 = vmatprep.subr.mxu0 0.0
    %109 = vmatpush1.msra.mxu0 %v62
    %110 = vmatprep.subr.mxu0 0.0
    %111 = vmatpush1.msra.mxu0 %v63
    %112 = vmatprep.subr.mxu0 0.0
    %113 = vmatpush1.msra.mxu0 %v64
    %114 = vmatprep.subr.mxu0 0.0
    %115 = vmatpush1.msra.mxu0 %v65
    %116 = vmatprep.subr.mxu0 0.0
    %117 = vmatpush1.msra.mxu0 %v66
    %118 = vmatprep.subr.mxu0 0.0
    %119 = vmatpush1.msra.mxu0 %v67
    %120 = vmatprep.subr.mxu0 0.0
    %121 = vmatpush1.msra.mxu0 %v68
    %122 = vmatprep.subr.mxu0 0.0
    %123 = vmatpush1.msra.mxu0 %v69
    %124 = vmatprep.subr.mxu0 0.0
    %125 = vmatpush1.msra.mxu0 %v70
    %126 = vmatprep.subr.mxu0 0.0
    %127 = vmatpush1.msra.mxu0 %v71
    %128 = vmatprep.subr.mxu0 0.0
    %129 = vmatpush1.msra.mxu0 %v72
    %130 = vmatprep.subr.mxu0 0.0
    %131 = vmatpush1.msra.mxu0 %v73
    %132 = vmatprep.subr.mxu0 0.0
    %133 = vmatpush1.msra.mxu0 %v74
    %134 = vmatprep.subr.mxu0 0.0
    %135 = vmatpush1.msra.mxu0 %v75
    %136 = vmatprep.subr.mxu0 0.0
    %137 = vmatpush1.msra.mxu0 %v76
    %138 = vmatprep.subr.mxu0 0.0
    %139 = vmatpush1.msra.mxu0 %v77
    %140 = vmatprep.subr.mxu0 0.0
    %141 = vmatpush1.msra.mxu0 %v78
    %142 = vmatprep.subr.mxu0 0.0
    %143 = vmatpush1.msra.mxu0 %v79
    %144 = vmatprep.mubr.f32.mxu0 %v41
    %145 = vmatmul.mubr.f32.gmra.mrb[0].mxu0 %v40
    %v146 = vpop.f32.mrb[0].mxu0
    %v147 = vadd.f32 0.0, %v146
    %v148 = vpop.f32.mrb[0].mxu0
    %149 = vmatprep.mubr.f32.mxu0 %v43
    %150 = vmatmul.mubr.f32.gmra.mrb[0].mxu0 %v42
    %v151 = vpop.f32.mrb[0].mxu0
    %v152 = vadd.f32 0.0, %v151
    %v153 = vpop.f32.mrb[0].mxu0
    %154 = vmatprep.mubr.f32.mxu0 %v45
    %155 = vmatmul.mubr.f32.gmra.mrb[0].mxu0 %v44
    %v156 = vpop.f32.mrb[0].mxu0
    %v157 = vadd.f32 0.0, %v156
    %v158 = vpop.f32.mrb[0].mxu0
    %159 = vmatprep.mubr.f32.mxu0 %v47
    %160 = vmatmul.mubr.f32.gmra.mrb[0].mxu0 %v46
    %v161 = vpop.f32.mrb[0].mxu0
    %v162 = vadd.f32 0.0, %v161
    %v163 = vpop.f32.mrb[0].mxu0
    %164 = vdwg.mxu0
    %165 = vst [vmem:[#allocation7] sm:$0xff] %v147
    %166 = vst [vmem:[#allocation7 + $0x8] sm:$0xff] %v152
    %167 = vst [vmem:[#allocation7 + $0x10] sm:$0xff] %v157
    %168 = vst [vmem:[#allocation7 + $0x18] sm:$0xff] %v162
    // Predicated region
    $region18: #{tpu_custom_call.1} parent=1 // pred_check
      _
    $region19: #{tpu_custom_call.1} parent=1 // pred_check_branch
      %170 = sbr.rel (0) target = $region21
    $region20: #{tpu_custom_call.1} parent=1 // pred_region
      %s172 = ssub.s32 512, 512
      %173 = vsyncadd [#allocation4], %s172
      %s174 = sshll.u32 [#allocation7], 4
      %s175 = int_to_ptr.vmem [resolvable:$true] %s174
      %180 = dma.vmem_to_hbm [thread:$0]  %s175, 512, %s2, [#allocation4], 128, 128, 8
    $region21: #{tpu_custom_call.1} parent=1 // pred_fallthru
      _
    // Predicated region
    $region22: #{tpu_custom_call.1} parent=1 // pred_check
      _
    $region23: #{tpu_custom_call.1} parent=1 // pred_check_branch
      %182 = sbr.rel (0) target = $region25
    $region24: #{tpu_custom_call.1} parent=1 // pred_region
      %183 = dma.done [#allocation4], 512
    $region25: #{tpu_custom_call.1} parent=1 // pred_fallthru
      _
    %184 = vsyncpa [#allocation3], 1
    %185 = vsyncpa [#allocation6], 1
    %186 = vsyncpa [#allocation4], 1

</llo_original>
